<compile_context>
chip_gen: v7x
topology: tpu7x:2x2x1
jax: 0.10.0
libtpu: 0.0.40
codegen_flags: <defaults>
</compile_context>

<pallas_src>
from typing import NamedTuple

import jax
import jax.numpy as jnp
from jax.experimental import pallas as pl
from jax.experimental.pallas import tpu as pltpu

HIDDEN = 64
LANE = 128


def _round_up(x, m):
    return pl.cdiv(x, m) * m


class PolicyParams(NamedTuple):
    w1: jax.Array     # (S, H)
    b1: jax.Array     # (1, H)
    w2: jax.Array     # (H, A)      exact fc2_mean weights
    b2: jax.Array     # (1, A)
    w2p: jax.Array    # (H, A_pad)  lane-padded copy, built once at init
    b2p: jax.Array    # (1, A_pad)
    sigma: jax.Array  # (1,)        Normal std-dev parameter


def init_params(key, state_space, action_space, hidden=HIDDEN):
    """Matches Policy.init_weights: normal_(weight), zeros_(bias), sigma=[10.0].

    The lane-padded fc2 copies (w2p/b2p) are built ONCE here (hoisted out of the
    forward path).  If training updates w2/b2, rebuild w2p/b2p after the optimizer
    step, not per forward call.
    """
    k1, k2 = jax.random.split(key)
    w1 = jax.random.normal(k1, (state_space, hidden), dtype=jnp.float32)
    b1 = jnp.zeros((1, hidden), dtype=jnp.float32)
    w2 = jax.random.normal(k2, (hidden, action_space), dtype=jnp.float32)
    b2 = jnp.zeros((1, action_space), dtype=jnp.float32)
    a_pad = _round_up(max(action_space, LANE), LANE)
    w2p = jnp.zeros((hidden, a_pad), jnp.float32).at[:, :action_space].set(w2)
    b2p = jnp.zeros((1, a_pad), jnp.float32).at[:, :action_space].set(b2)
    sigma = jnp.asarray([10.0], dtype=jnp.float32)
    return PolicyParams(w1, b1, w2, b2, w2p, b2p, sigma)


def policy_kernel(x_ref, w1_ref, b1_ref, w2_ref, b2_ref, mu_ref):
    # fc1: (TB, S) @ (S, H) + (1, H), then ReLU.
    h = jnp.dot(x_ref[...], w1_ref[...], preferred_element_type=jnp.float32)
    h = jnp.maximum(h + b1_ref[...], 0.0)
    # fc2_mean: (TB, H) @ (H, A_out) + (1, A_out).  A_out is either the lane-padded 128
    # (mid-size batches, unmasked stores) or the exact action dim (huge batches).
    mu = jnp.dot(h, w2_ref[...], preferred_element_type=jnp.float32) + b2_ref[...]
    mu_ref[...] = mu.astype(mu_ref.dtype)


def _policy_pallas(x, w1, b1, w2, b2, *, block_b):
    """x:(B,S), w2:(H,A_out), b2:(1,A_out) -> mu:(B,A_out) via a batch-tiled pallas_call."""
    B, S = x.shape
    H = w1.shape[1]
    A_out = w2.shape[1]

    # Batch tile: big enough to amortize the fixed per-step pipeline overhead, at least
    # 2 grid steps once B > 16 (so both v7x TensorCores get work), rounded to 8 sublanes.
    # The ragged last tile (when TB does not divide B) is handled by Pallas directly --
    # out-of-range rows of the final block are discarded on store, so there is no x pad
    # copy and no output row slice.
    n_steps = max(pl.cdiv(B, block_b), 2 if B > 16 else 1)
    tb = min(block_b, max(8, _round_up(pl.cdiv(B, n_steps), 8)))
    grid = (pl.cdiv(B, tb),)

    flops = 2 * B * (S * H + H * A_out)
    bytes_accessed = 4 * (B * S + S * H + H + H * A_out + A_out + B * A_out)

    return pl.pallas_call(
        policy_kernel,
        out_shape=jax.ShapeDtypeStruct((B, A_out), jnp.float32),
        grid=grid,
        in_specs=[
            pl.BlockSpec((tb, S), lambda i: (i, 0)),      # x: streamed per batch tile
            pl.BlockSpec((S, H), lambda i: (0, 0)),       # W1: VMEM-resident
            pl.BlockSpec((1, H), lambda i: (0, 0)),       # b1: resident
            pl.BlockSpec((H, A_out), lambda i: (0, 0)),   # W2: resident
            pl.BlockSpec((1, A_out), lambda i: (0, 0)),   # b2: resident
        ],
        out_specs=pl.BlockSpec((tb, A_out), lambda i: (i, 0)),
        compiler_params=pltpu.CompilerParams(
            dimension_semantics=("parallel",)),
        cost_estimate=pl.CostEstimate(
            flops=flops, transcendentals=0, bytes_accessed=bytes_accessed),
    )(x, w1, b1, w2, b2)


def policy_forward(x, params, *, block_b=4096, min_pallas_batch=256,
                   narrow_out_min_batch=16384):
    """Forward pass of Policy: returns (mu, sigma); Normal(mu, sigma) is the module's dist.

    Dispatch on batch size B:
      * B <= min_pallas_batch          : plain fused XLA (pallas launch overhead dominates
                                         for the single-state actor path).
      * min_pallas_batch < B < narrow  : Pallas, lane-dense 128-wide padded output
                                         (unmasked vst), lanes [A:] sliced off after.
      * B >= narrow_out_min_batch      : Pallas, exact (TB, A) output -- masked stores but
                                         ~32x fewer writeback bytes on the dominant HBM
                                         stream, which wins at training-size batches.
    """
    B, S = x.shape
    A = params.w2.shape[1]

    if B <= min_pallas_batch:
        h = jnp.maximum(x @ params.w1 + params.b1, 0.0)
        mu = h @ params.w2 + params.b2
    elif B < narrow_out_min_batch:
        mu_pad = _policy_pallas(x, params.w1, params.b1, params.w2p, params.b2p,
                                block_b=block_b)
        # Lanes [A:] are exactly zero (weights/bias zero-padded); slice so callers always
        # see the exact (B, A) mu.  Never reduce over mu_pad directly.
        mu = mu_pad[:, :A]
    else:
        mu = _policy_pallas(x, params.w1, params.b1, params.w2, params.b2,
                            block_b=block_b)
    # sigma is a scalar parameter; Normal(mu, sigma) broadcasts it lazily downstream, so
    # no (B, A) sigma tensor is ever materialized.
    return mu, params.sigma


if __name__ == "__main__":
    state_space = 8
    action_space = 4

    key = jax.random.PRNGKey(0)
    kx, kp = jax.random.split(key)
    params = init_params(kp, state_space, action_space)

    def ref_mu(xv):
        h = jnp.maximum(xv @ params.w1 + params.b1, 0.0)
        return h @ params.w2 + params.b2

    # 1) Tiny actor-path batch (B=8): plain-XLA dispatch (no pallas launch overhead).
    x_small = jax.random.normal(kx, (8, state_space), dtype=jnp.float32)
    mu_s, sig = policy_forward(x_small, params)
    jax.block_until_ready((mu_s, sig))
    assert mu_s.shape == (8, action_space)
    assert jnp.allclose(mu_s, ref_mu(x_small), atol=1e-4, rtol=1e-4)
    assert jnp.allclose(sig, params.sigma)

    # 2) Pallas lane-dense path (forced via min_pallas_batch=0) at a small shape.
    #    B=40 -> TB=24, grid=(2,), second tile is ragged (only 16 valid rows).
    x_mid = jax.random.normal(kx, (40, state_space), dtype=jnp.float32)
    mu_m, _ = policy_forward(x_mid, params, min_pallas_batch=0)
    jax.block_until_ready(mu_m)
    assert mu_m.shape == (40, action_space)
    assert jnp.allclose(mu_m, ref_mu(x_mid), atol=1e-4, rtol=1e-4)

    # 3) Pallas narrow-output path (forced) -- exact (TB, A) writeback, masked stores.
    mu_n, _ = policy_forward(x_mid, params, min_pallas_batch=0, narrow_out_min_batch=0)
    jax.block_until_ready(mu_n)
    assert mu_n.shape == (40, action_space)
    assert jnp.allclose(mu_n, ref_mu(x_mid), atol=1e-4, rtol=1e-4)

    # Normal(mu, sigma) broadcast sanity (done lazily outside the kernel):
    assert jnp.broadcast_to(sig, mu_m.shape).shape == mu_m.shape

    print("KERNEL_OK")
</pallas_src>

<mosaic_0001>
module attributes {stable_mosaic.version = 11 : i64} {
  func.func @policy_kernel(%arg0: i32, %arg1: memref<24x8xf32, #tpu.memory_space<vmem>>, %arg2: memref<8x64xf32, #tpu.memory_space<vmem>>, %arg3: memref<1x64xf32, #tpu.memory_space<vmem>>, %arg4: memref<64x128xf32, #tpu.memory_space<vmem>>, %arg5: memref<1x128xf32, #tpu.memory_space<vmem>>, %arg6: memref<24x128xf32, #tpu.memory_space<vmem>>) attributes {dimension_semantics = [#tpu.dimension_semantics<parallel>], iteration_bounds = array<i64: 2>, scalar_prefetch = 0 : i64, scratch_operands = 0 : i64, tpu.core_type = #tpu.core_type<tc>, window_params = [{transform_indices = @transform_0, window_bounds = array<i64: 24, 8>}, {pipeline_mode = #tpu.pipeline_mode<synchronous>, transform_indices = @transform_1, window_bounds = array<i64: 8, 64>}, {pipeline_mode = #tpu.pipeline_mode<synchronous>, transform_indices = @transform_2, window_bounds = array<i64: 1, 64>}, {pipeline_mode = #tpu.pipeline_mode<synchronous>, transform_indices = @transform_3, window_bounds = array<i64: 64, 128>}, {pipeline_mode = #tpu.pipeline_mode<synchronous>, transform_indices = @transform_4, window_bounds = array<i64: 1, 128>}, {transform_indices = @transform_5, window_bounds = array<i64: 24, 128>}]} {
    %c0 = arith.constant 0 : index
    %c0_0 = arith.constant 0 : index
    %0 = vector.load %arg1[%c0, %c0_0] : memref<24x8xf32, #tpu.memory_space<vmem>>, vector<24x8xf32>
    %c0_1 = arith.constant 0 : index
    %c0_2 = arith.constant 0 : index
    %1 = vector.load %arg2[%c0_1, %c0_2] : memref<8x64xf32, #tpu.memory_space<vmem>>, vector<8x64xf32>
    %cst = arith.constant dense<0.000000e+00> : vector<24x64xf32>
    %2 = tpu.matmul %0, %1, %cst {dimension_numbers = #tpu.dot_dimension_numbers<[1], [0], [0], [1], [0, 0, 1, 1], [], []>} : vector<24x8xf32>, vector<8x64xf32>, vector<24x64xf32> -> vector<24x64xf32>
    %c0_3 = arith.constant 0 : index
    %c0_4 = arith.constant 0 : index
    %3 = vector.load %arg3[%c0_3, %c0_4] : memref<1x64xf32, #tpu.memory_space<vmem>>, vector<1x64xf32>
    %4 = vector.broadcast %3 : vector<1x64xf32> to vector<24x64xf32>
    %5 = arith.addf %2, %4 : vector<24x64xf32>
    %cst_5 = arith.constant 0.000000e+00 : f32
    %6 = vector.broadcast %cst_5 : f32 to vector<24x64xf32>
    %7 = arith.maximumf %5, %6 : vector<24x64xf32>
    %c0_6 = arith.constant 0 : index
    %c0_7 = arith.constant 0 : index
    %8 = vector.load %arg4[%c0_6, %c0_7] : memref<64x128xf32, #tpu.memory_space<vmem>>, vector<64x128xf32>
    %cst_8 = arith.constant dense<0.000000e+00> : vector<24x128xf32>
    %9 = tpu.matmul %7, %8, %cst_8 {dimension_numbers = #tpu.dot_dimension_numbers<[1], [0], [0], [1], [0, 0, 1, 1], [], []>} : vector<24x64xf32>, vector<64x128xf32>, vector<24x128xf32> -> vector<24x128xf32>
    %c0_9 = arith.constant 0 : index
    %c0_10 = arith.constant 0 : index
    %10 = vector.load %arg5[%c0_9, %c0_10] : memref<1x128xf32, #tpu.memory_space<vmem>>, vector<1x128xf32>
    %11 = vector.broadcast %10 : vector<1x128xf32> to vector<24x128xf32>
    %12 = arith.addf %9, %11 : vector<24x128xf32>
    %c0_11 = arith.constant 0 : index
    %c0_12 = arith.constant 0 : index
    %13 = vector.load %arg6[%c0_11, %c0_12] : memref<24x128xf32, #tpu.memory_space<vmem>>, vector<24x128xf32>
    tpu.vector_store %arg6[%c0_11, %c0_12], %12 {strides = array<i32>} : memref<24x128xf32, #tpu.memory_space<vmem>>, vector<24x128xf32>,
    return
  }
  func.func @transform_0(%arg0: i32) -> (i32, i32) {
    %c0_i32 = arith.constant 0 : i32
    %c0_i32_0 = arith.constant 0 : i32
    return %arg0, %c0_i32 : i32, i32
  }
  func.func @transform_1(%arg0: i32) -> (i32, i32) {
    %c0_i32 = arith.constant 0 : i32
    %c0_i32_0 = arith.constant 0 : i32
    %c0_i32_1 = arith.constant 0 : i32
    return %c0_i32, %c0_i32_0 : i32, i32
  }
  func.func @transform_2(%arg0: i32) -> (i32, i32) {
    %c0_i32 = arith.constant 0 : i32
    %c0_i32_0 = arith.constant 0 : i32
    %c0_i32_1 = arith.constant 0 : i32
    return %c0_i32, %c0_i32_0 : i32, i32
  }
  func.func @transform_3(%arg0: i32) -> (i32, i32) {
    %c0_i32 = arith.constant 0 : i32
    %c0_i32_0 = arith.constant 0 : i32
    %c0_i32_1 = arith.constant 0 : i32
    return %c0_i32, %c0_i32_0 : i32, i32
  }
  func.func @transform_4(%arg0: i32) -> (i32, i32) {
    %c0_i32 = arith.constant 0 : i32
    %c0_i32_0 = arith.constant 0 : i32
    %c0_i32_1 = arith.constant 0 : i32
    return %c0_i32, %c0_i32_0 : i32, i32
  }
  func.func @transform_5(%arg0: i32) -> (i32, i32) {
    %c0_i32 = arith.constant 0 : i32
    %c0_i32_0 = arith.constant 0 : i32
    return %arg0, %c0_i32 : i32, i32
  }
}

</mosaic_0001>

<llo_original>
// kernel: tpu_custom_call.1
$region0: #{tpu_custom_call.1}
  #allocation0 [shape = 'u32[]', space=smem, size = 0x4, offset = 0x4, fixed_abs, tag = 'smem constant byte address 0x4 - core index']
  #allocation1 [shape = 'u32[144,128]{1,0:T(1,128)}', space=vmem, size = 0x12000, scoped, tag = 'internal scratch']
  %s0 = inlined_call_operand.vmem [shape: f32[40,8], index: 0, kind: input, shape index: {}]
  %s1 = inlined_call_operand.vmem [shape: f32[8,64], index: 1, kind: input, shape index: {}]
  %s2 = inlined_call_operand.vmem [shape: f32[1,64], index: 2, kind: input, shape index: {}]
  %s3 = inlined_call_operand.hbm [shape: f32[64,128], index: 3, kind: input, shape index: {}]
  %s4 = inlined_call_operand.vmem [shape: f32[1,128], index: 4, kind: input, shape index: {}]
  %s5 = inlined_call_operand.hbm [shape: f32[40,128], index: 5, kind: output, shape index: {}]
  %s6 = sld [smem:[#allocation0]]
  $region57: #{tpu_custom_call.1} parent=0
    _
  %s8 = ssub.s32 1, %s6
  %s9 = scalar_select 0, %s8, %s6
  $region1: #{tpu_custom_call.1} parent=0
    #allocation2 [shape = 'u8[32768]{0}', space=vmem, size = 0x8000, scoped, tag = 'input window, operand 3, single buffered']
    #allocation3 [shape = 's32[2]{0}', space=sflag, size = 0x8, scoped, tag = 'scoped memory for tpu_custom_call.1']
    #allocation4 [shape = 's32[2]{0}', space=sflag, size = 0x8, scoped, tag = 'scoped memory for tpu_custom_call.1']
    #allocation5 [shape = 'u8[24576]{0}', space=vmem, size = 0x6000, scoped, tag = 'output window, operand 0']
    %10 = vsyncpa [#allocation3], 0
    %11 = vsyncpa [#allocation4], 0
    %s12 = scalar_lea.sflag [#allocation4], 1
    %13 = vsyncpa %s12, 0
    loop: start=0, step=1, limit=4
    $region2: #{tpu_custom_call.1} parent=1 // loop_pre_header
      _
    $region3: #{tpu_custom_call.1} parent=1 // loop_header
      %s15 = sphi 0, %s19
      %p16 = scmp.ge.s32.totalorder %s15, 4
      %s25 = sphi 0, %s27
      %s28 = sphi 0, %s25
      %s29 = sphi 0, %s28
      %s45 = sphi 0, %s29
      %s49 = sphi 0, %s49
      %s51 = sphi 0, %s49
      %s52 = sphi 0, %s51
      %s66 = sphi 0, %s52
      %s70 = sphi 0, %s70
      %s72 = sphi 0, %s70
      %s73 = sphi 0, %s72
      %s87 = sphi 0, %s73
      %s91 = sphi 0, %s91
      %s93 = sphi 0, %s91
      %s94 = sphi 0, %s93
      %s108 = sphi 0, %s94
      %s112 = sphi 0, %s112
      %s114 = sphi 0, %s112
      %s115 = sphi 0, %s114
      %s129 = sphi 0, %s115
      %s135 = sphi 0, %s137
      %s138 = sphi 0, %s135
      %s139 = sphi 0, %s138
      %s155 = sphi 0, %s139
    $region4: #{tpu_custom_call.1} parent=1 // loop_header_branch
      %18 = sbr.rel (%p16) target = $region8
    $region5: #{tpu_custom_call.1} parent=1 // loop_body
      %s20 = ssub.s32 %s15, 1
      %s21 = ssub.s32 %s15, 2
      %s22 = sadd.s32 %s15, 1
      %s23 = ssub.s32 %s15, %s22
      %p24 = scmp.eq.s32.totalorder %s23, 0
      %s26 = sadd.s32 %s25, 1
      %s27 = scalar_select %p24, %s25, %s26
      %p30 = pneg %p24
      %p31 = scmp.eq.s32.totalorder %s15, 1
      %p32 = por %p30, %p31
      %p33 = scmp.ne.s32.totalorder %s25, %s28
      %p34 = scmp.eq.s32.totalorder %s15, 0
      %p35 = por %p33, %p34
      %p36 = scmp.ne.s32.totalorder %s25, %s28
      %p37 = scmp.eq.s32.totalorder %s20, 1
      %p38 = por %p36, %p37
      %p39 = scmp.ne.s32.totalorder %s28, %s29
      %p40 = scmp.eq.s32.totalorder %s20, 0
      %p41 = por %p39, %p40
      %p42 = scmp.ne.s32.totalorder %s28, %s29
      %p43 = scmp.eq.s32.totalorder %s21, 1
      %p44 = por %p42, %p43
      %p46 = scmp.ne.s32.totalorder %s29, %s45
      %p47 = scmp.eq.s32.totalorder %s21, 0
      %p48 = por %p46, %p47
      %s50 = sadd.s32 %s49, 1
      %p53 = scmp.eq.s32.totalorder %s15, 1
      %p54 = scmp.ne.s32.totalorder %s49, %s51
      %p55 = scmp.eq.s32.totalorder %s15, 0
      %p56 = por %p54, %p55
      %p57 = scmp.ne.s32.totalorder %s49, %s51
      %p58 = scmp.eq.s32.totalorder %s20, 1
      %p59 = por %p57, %p58
      %p60 = scmp.ne.s32.totalorder %s51, %s52
      %p61 = scmp.eq.s32.totalorder %s20, 0
      %p62 = por %p60, %p61
      %p63 = scmp.ne.s32.totalorder %s51, %s52
      %p64 = scmp.eq.s32.totalorder %s21, 1
      %p65 = por %p63, %p64
      %p67 = scmp.ne.s32.totalorder %s52, %s66
      %p68 = scmp.eq.s32.totalorder %s21, 0
      %p69 = por %p67, %p68
      %s71 = sadd.s32 %s70, 1
      %p74 = scmp.eq.s32.totalorder %s15, 1
      %p75 = scmp.ne.s32.totalorder %s70, %s72
      %p76 = scmp.eq.s32.totalorder %s15, 0
      %p77 = por %p75, %p76
      %p78 = scmp.ne.s32.totalorder %s70, %s72
      %p79 = scmp.eq.s32.totalorder %s20, 1
      %p80 = por %p78, %p79
      %p81 = scmp.ne.s32.totalorder %s72, %s73
      %p82 = scmp.eq.s32.totalorder %s20, 0
      %p83 = por %p81, %p82
      %p84 = scmp.ne.s32.totalorder %s72, %s73
      %p85 = scmp.eq.s32.totalorder %s21, 1
      %p86 = por %p84, %p85
      %p88 = scmp.ne.s32.totalorder %s73, %s87
      %p89 = scmp.eq.s32.totalorder %s21, 0
      %p90 = por %p88, %p89
      %s92 = sadd.s32 %s91, 1
      %p95 = scmp.eq.s32.totalorder %s15, 1
      %p96 = scmp.ne.s32.totalorder %s91, %s93
      %p97 = scmp.eq.s32.totalorder %s15, 0
      %p98 = por %p96, %p97
      %p99 = scmp.ne.s32.totalorder %s91, %s93
      %p100 = scmp.eq.s32.totalorder %s20, 1
      %p101 = por %p99, %p100
      %p102 = scmp.ne.s32.totalorder %s93, %s94
      %p103 = scmp.eq.s32.totalorder %s20, 0
      %p104 = por %p102, %p103
      %p105 = scmp.ne.s32.totalorder %s93, %s94
      %p106 = scmp.eq.s32.totalorder %s21, 1
      %p107 = por %p105, %p106
      %p109 = scmp.ne.s32.totalorder %s94, %s108
      %p110 = scmp.eq.s32.totalorder %s21, 0
      %p111 = por %p109, %p110
      %s113 = sadd.s32 %s112, 1
      %p116 = scmp.eq.s32.totalorder %s15, 1
      %p117 = scmp.ne.s32.totalorder %s112, %s114
      %p118 = scmp.eq.s32.totalorder %s15, 0
      %p119 = por %p117, %p118
      %p120 = scmp.ne.s32.totalorder %s112, %s114
      %p121 = scmp.eq.s32.totalorder %s20, 1
      %p122 = por %p120, %p121
      %p123 = scmp.ne.s32.totalorder %s114, %s115
      %p124 = scmp.eq.s32.totalorder %s20, 0
      %p125 = por %p123, %p124
      %p126 = scmp.ne.s32.totalorder %s114, %s115
      %p127 = scmp.eq.s32.totalorder %s21, 1
      %p128 = por %p126, %p127
      %p130 = scmp.ne.s32.totalorder %s115, %s129
      %p131 = scmp.eq.s32.totalorder %s21, 0
      %p132 = por %p130, %p131
      %s133 = ssub.s32 %s15, %s22
      %p134 = scmp.eq.s32.totalorder %s133, 0
      %s136 = sadd.s32 %s135, 1
      %s137 = scalar_select %p134, %s135, %s136
      %p140 = pneg %p134
      %p141 = scmp.eq.s32.totalorder %s15, 1
      %p142 = por %p140, %p141
      %p143 = scmp.ne.s32.totalorder %s135, %s138
      %p144 = scmp.eq.s32.totalorder %s15, 0
      %p145 = por %p143, %p144
      %p146 = scmp.ne.s32.totalorder %s135, %s138
      %p147 = scmp.eq.s32.totalorder %s20, 1
      %p148 = por %p146, %p147
      %p149 = scmp.ne.s32.totalorder %s138, %s139
      %p150 = scmp.eq.s32.totalorder %s20, 0
      %p151 = por %p149, %p150
      %p152 = scmp.ne.s32.totalorder %s138, %s139
      %p153 = scmp.eq.s32.totalorder %s21, 1
      %p154 = por %p152, %p153
      %p156 = scmp.ne.s32.totalorder %s139, %s155
      %p157 = scmp.eq.s32.totalorder %s21, 0
      %p158 = por %p156, %p157
      %p159 = scmp.le.s32.totalorder 1, %s15
      %p160 = scmp.lt.s32.totalorder %s15, 3
      %p161 = pnand %p159, %p160
      %p162 = pneg %p161
      // Predicated region
      $region9: #{tpu_custom_call.1} parent=5 // pred_check
        _
      $region10: #{tpu_custom_call.1} parent=5 // pred_check_branch
        %164 = sbr.rel (%p161) target = $region12
      $region11: #{tpu_custom_call.1} parent=5 // pred_region
        %s165 = ssub.s32 %s15, 1
        // Predicated region
        $region13: #{tpu_custom_call.1} parent=11 // pred_check
          %p166 = pneg %p62
        $region14: #{tpu_custom_call.1} parent=11 // pred_check_branch
          %168 = sbr.rel (%p166) target = $region16
        $region15: #{tpu_custom_call.1} parent=11 // pred_region
          _
        $region16: #{tpu_custom_call.1} parent=11 // pred_fallthru
          _
        // Predicated region
        $region17: #{tpu_custom_call.1} parent=11 // pred_check
          %p169 = pneg %p83
        $region18: #{tpu_custom_call.1} parent=11 // pred_check_branch
          %171 = sbr.rel (%p169) target = $region20
        $region19: #{tpu_custom_call.1} parent=11 // pred_region
          _
        $region20: #{tpu_custom_call.1} parent=11 // pred_fallthru
          _
        // Predicated region
        $region21: #{tpu_custom_call.1} parent=11 // pred_check
          %p172 = pneg %p104
        $region22: #{tpu_custom_call.1} parent=11 // pred_check_branch
          %174 = sbr.rel (%p172) target = $region24
        $region23: #{tpu_custom_call.1} parent=11 // pred_region
          %s176 = ssub.s32 1024, 1024
          %177 = vsyncadd [#allocation3], %s176
          %s178 = sshll.u32 [#allocation2], 4
          %s179 = int_to_ptr.vmem [resolvable:$true] %s178
          %184 = dma.hbm_to_vmem [thread:$0]  %s3, 1024, %s179, [#allocation3], 128, 128, 8
        $region24: #{tpu_custom_call.1} parent=11 // pred_fallthru
          _
        // Predicated region
        $region25: #{tpu_custom_call.1} parent=11 // pred_check
          %p185 = pneg %p125
        $region26: #{tpu_custom_call.1} parent=11 // pred_check_branch
          %187 = sbr.rel (%p185) target = $region28
        $region27: #{tpu_custom_call.1} parent=11 // pred_region
          _
        $region28: #{tpu_custom_call.1} parent=11 // pred_fallthru
          _
      $region12: #{tpu_custom_call.1} parent=5 // pred_fallthru
        _
      %p188 = scmp.lt.s32.totalorder %s15, 2
      // Predicated region
      $region29: #{tpu_custom_call.1} parent=5 // pred_check
        %p189 = pneg %p188
      $region30: #{tpu_custom_call.1} parent=5 // pred_check_branch
        %191 = sbr.rel (%p189) target = $region32
      $region31: #{tpu_custom_call.1} parent=5 // pred_region
        // Predicated region
        $region33: #{tpu_custom_call.1} parent=31 // pred_check
          %p192 = pneg %p35
        $region34: #{tpu_custom_call.1} parent=31 // pred_check_branch
          %194 = sbr.rel (%p192) target = $region36
        $region35: #{tpu_custom_call.1} parent=31 // pred_region
          %s195 = smul.u32 3, %s15
          %s196 = ssub.s32 5, %s195
          %p197 = scmp.lt.s32.totalorder %s196, 3
          %s198 = scalar_select %p197, %s196, 3
          %s199 = smul.u32 128, %s198
          %p200 = scmp.lt.s32.totalorder %s195, 4
          %s201 = scalar_select %p200, %s195, 4
          %s202 = smul.addr %s201, 8
          %s203 = scalar_lea.vmem %s0, %s202
          %s204 = smul.u32 3, %s15
          %s205 = ssub.s32 5, %s204
          %p206 = scmp.lt.s32.totalorder %s205, 3
          %s207 = scalar_select %p206, %s205, 3
          %s208 = smul.u32 128, %s207
        $region36: #{tpu_custom_call.1} parent=31 // pred_fallthru
          _
      $region32: #{tpu_custom_call.1} parent=5 // pred_fallthru
        _
      %p209 = scmp.le.s32.totalorder 1, %s15
      %p210 = scmp.lt.s32.totalorder %s15, 3
      %p211 = pnand %p209, %p210
      %p212 = pneg %p211
      // Predicated region
      $region37: #{tpu_custom_call.1} parent=5 // pred_check
        _
      $region38: #{tpu_custom_call.1} parent=5 // pred_check_branch
        %214 = sbr.rel (%p211) target = $region40
      $region39: #{tpu_custom_call.1} parent=5 // pred_region
        %s215 = ssub.s32 %s15, 1
        // Predicated region
        $region41: #{tpu_custom_call.1} parent=39 // pred_check
          %p216 = pneg %p104
        $region42: #{tpu_custom_call.1} parent=39 // pred_check_branch
          %218 = sbr.rel (%p216) target = $region44
        $region43: #{tpu_custom_call.1} parent=39 // pred_region
          %219 = dma.done [#allocation3], 1024
        $region44: #{tpu_custom_call.1} parent=39 // pred_fallthru
          _
        %s220 = smul.u32 3, %s20
        %s221 = ssub.s32 5, %s220
        %p222 = scmp.lt.s32.totalorder %s221, 3
        %s223 = scalar_select %p222, %s221, 3
        %s224 = smul.u32 128, %s223
        %p225 = scmp.lt.s32.totalorder %s220, 4
        %s226 = scalar_select %p225, %s220, 4
        %s227 = smul.addr %s226, 8
        %s228 = scalar_lea.vmem %s0, %s227
        %p229 = pneg %p41
        %p230 = pneg %p38
        %p231 = pneg %p62
        %p232 = pneg %p59
        %p233 = pneg %p83
        %p234 = pneg %p80
        %p235 = pneg %p104
        %p236 = pneg %p101
        %p237 = pneg %p125
        %p238 = pneg %p122
        %p239 = pneg %p151
        %p240 = pneg %p148
        %s241 = sand.u32 %s138, 1
        %s242 = scalar_lea.sflag [#allocation4], %s241
        %s243 = sand.u32 %s138, 1
        %s244 = smul.addr %s243, 24
        %s245 = scalar_lea.vmem [#allocation5], %s244
        %s246 = smul.u32 3, %s20
        %s247 = ssub.s32 5, %s246
        %p248 = scmp.lt.s32.totalorder %s247, 3
        %s249 = scalar_select %p248, %s247, 3
        %s250 = smul.u32 128, %s249
        %p251 = scmp.lt.s32.totalorder %s246, 4
        %s252 = scalar_select %p251, %s246, 4
        %s253 = smul.addr %s252, 8
        %s254 = scalar_lea.vmem %s0, %s253
        %s255 = smul.u32 3, %s20
        %s256 = ssub.s32 5, %s255
        %p257 = scmp.lt.s32.totalorder %s256, 3
        %s258 = scalar_select %p257, %s256, 3
        %s259 = smul.u32 128, %s258
        %s260 = smul.u32 3, %s20
        %s261 = ssub.s32 5, %s260
        %p262 = scmp.lt.s32.totalorder %s261, 3
        %s263 = scalar_select %p262, %s261, 3
        %s264 = smul.u32 128, %s263
        %v265 = vld [vmem:[%s254] sm:$0xff]
        %v266 = vld [vmem:[%s254 + $0x8] sm:$0xff]
        %v267 = vld [vmem:[%s254 + $0x10] sm:$0xff]
        %v268 = vld [vmem:[%s1] sm:$0xff]
        %v269 = vld [vmem:[%s2] sm:$0x1]
        %v271 = vlaneseq
        %v272 = vshrl.u32 %v271, 7
        %v273 = vsub.s32 0, %v272
        %v274 = vrot.slane %v269, %v273
        %vm276 = vcmask 64512
        %v278 = vsel %vm276, %v265, 0
        %v281 = vsel %vm276, %v266, 0
        %v284 = vsel %vm276, %v267, 0
        %286 = vmatprep.subr.mxu0 0.0
        %287 = vmatpush1.msra.mxu0 %v268
        %288 = vmatprep.subr.mxu0 0.0
        %289 = vmatpush1.msra.mxu0 0.0
        %290 = vmatprep.subr.mxu0 0.0
        %291 = vmatpush1.msra.mxu0 0.0
        %292 = vmatprep.subr.mxu0 0.0
        %293 = vmatpush1.msra.mxu0 0.0
        %294 = vmatprep.subr.mxu0 0.0
        %295 = vmatpush1.msra.mxu0 0.0
        %296 = vmatprep.subr.mxu0 0.0
        %297 = vmatpush1.msra.mxu0 0.0
        %298 = vmatprep.subr.mxu0 0.0
        %299 = vmatpush1.msra.mxu0 0.0
        %300 = vmatprep.subr.mxu0 0.0
        %301 = vmatpush1.msra.mxu0 0.0
        %302 = vmatprep.subr.mxu0 0.0
        %303 = vmatpush1.msra.mxu0 0.0
        %304 = vmatprep.subr.mxu0 0.0
        %305 = vmatpush1.msra.mxu0 0.0
        %306 = vmatprep.subr.mxu0 0.0
        %307 = vmatpush1.msra.mxu0 0.0
        %308 = vmatprep.subr.mxu0 0.0
        %309 = vmatpush1.msra.mxu0 0.0
        %310 = vmatprep.subr.mxu0 0.0
        %311 = vmatpush1.msra.mxu0 0.0
        %312 = vmatprep.subr.mxu0 0.0
        %313 = vmatpush1.msra.mxu0 0.0
        %314 = vmatprep.subr.mxu0 0.0
        %315 = vmatpush1.msra.mxu0 0.0
        %316 = vmatprep.subr.mxu0 0.0
        %317 = vmatpush1.msra.mxu0 0.0
        %318 = vmatprep.subr.mxu0 0.0
        %319 = vmatpush1.msra.mxu0 0.0
        %320 = vmatprep.subr.mxu0 0.0
        %321 = vmatpush1.msra.mxu0 0.0
        %322 = vmatprep.subr.mxu0 0.0
        %323 = vmatpush1.msra.mxu0 0.0
        %324 = vmatprep.subr.mxu0 0.0
        %325 = vmatpush1.msra.mxu0 0.0
        %326 = vmatprep.subr.mxu0 0.0
        %327 = vmatpush1.msra.mxu0 0.0
        %328 = vmatprep.subr.mxu0 0.0
        %329 = vmatpush1.msra.mxu0 0.0
        %330 = vmatprep.subr.mxu0 0.0
        %331 = vmatpush1.msra.mxu0 0.0
        %332 = vmatprep.subr.mxu0 0.0
        %333 = vmatpush1.msra.mxu0 0.0
        %334 = vmatprep.subr.mxu0 0.0
        %335 = vmatpush1.msra.mxu0 0.0
        %336 = vmatprep.subr.mxu0 0.0
        %337 = vmatpush1.msra.mxu0 0.0
        %338 = vmatprep.subr.mxu0 0.0
        %339 = vmatpush1.msra.mxu0 0.0
        %340 = vmatprep.subr.mxu0 0.0
        %341 = vmatpush1.msra.mxu0 0.0
        %342 = vmatprep.subr.mxu0 0.0
        %343 = vmatpush1.msra.mxu0 0.0
        %344 = vmatprep.subr.mxu0 0.0
        %345 = vmatpush1.msra.mxu0 0.0
        %346 = vmatprep.subr.mxu0 0.0
        %347 = vmatpush1.msra.mxu0 0.0
        %348 = vmatprep.subr.mxu0 0.0
        %349 = vmatpush1.msra.mxu0 0.0
        %350 = vmatprep.mubr.f32.mxu0 0.0
        %351 = vmatmul.mubr.f32.gmra.mrb[0].mxu0 %v278
        %v352 = vpop.f32.mrb[0].mxu0
        %v353 = vadd.f32 %v274, %v352
        %v354 = vpop.f32.mrb[0].mxu0
        %355 = vmatprep.mubr.f32.mxu0 0.0
        %356 = vmatmul.mubr.f32.gmra.mrb[0].mxu0 %v281
        %v357 = vpop.f32.mrb[0].mxu0
        %v358 = vadd.f32 %v274, %v357
        %v359 = vpop.f32.mrb[0].mxu0
        %360 = vmatprep.mubr.f32.mxu0 0.0
        %361 = vmatmul.mubr.f32.gmra.mrb[0].mxu0 %v284
        %v362 = vpop.f32.mrb[0].mxu0
        %v363 = vadd.f32 %v274, %v362
        %v364 = vpop.f32.mrb[0].mxu0
        %365 = vdwg.mxu0
        %v366 = vmax.f32 %v353, 0.0
        %v367 = vmax.f32 %v358, 0.0
        %v368 = vmax.f32 %v363, 0.0
        %v369 = vld [vmem:[#allocation2] sm:$0xff]
        %v370 = vld [vmem:[#allocation2 + $0x8] sm:$0xff]
        %v371 = vld [vmem:[#allocation2 + $0x10] sm:$0xff]
        %v372 = vld [vmem:[#allocation2 + $0x18] sm:$0xff]
        %v373 = vld [vmem:[#allocation2 + $0x20] sm:$0xff]
        %v374 = vld [vmem:[#allocation2 + $0x28] sm:$0xff]
        %v375 = vld [vmem:[#allocation2 + $0x30] sm:$0xff]
        %v376 = vld [vmem:[#allocation2 + $0x38] sm:$0xff]
        %v377 = vld [vmem:[%s4] sm:$0x1]
        %v379 = vlaneseq
        %v380 = vshrl.u32 %v379, 7
        %v381 = vsub.s32 0, %v380
        %v382 = vrot.slane %v377, %v381
        %vm384 = vcmask 523264
        %v386 = vsel %vm384, %v366, 0
        %v389 = vsel %vm384, %v367, 0
        %v392 = vsel %vm384, %v368, 0
        %394 = vmatprep.subr.mxu0 0.0
        %395 = vmatpush1.msra.mxu0 %v369
        %396 = vmatprep.subr.mxu0 0.0
        %397 = vmatpush1.msra.mxu0 %v370
        %398 = vmatprep.subr.mxu0 0.0
        %399 = vmatpush1.msra.mxu0 %v371
        %400 = vmatprep.subr.mxu0 0.0
        %401 = vmatpush1.msra.mxu0 %v372
        %402 = vmatprep.subr.mxu0 0.0
        %403 = vmatpush1.msra.mxu0 %v373
        %404 = vmatprep.subr.mxu0 0.0
        %405 = vmatpush1.msra.mxu0 %v374
        %406 = vmatprep.subr.mxu0 0.0
        %407 = vmatpush1.msra.mxu0 %v375
        %408 = vmatprep.subr.mxu0 0.0
        %409 = vmatpush1.msra.mxu0 %v376
        %410 = vmatprep.subr.mxu0 0.0
        %411 = vmatpush1.msra.mxu0 0.0
        %412 = vmatprep.subr.mxu0 0.0
        %413 = vmatpush1.msra.mxu0 0.0
        %414 = vmatprep.subr.mxu0 0.0
        %415 = vmatpush1.msra.mxu0 0.0
        %416 = vmatprep.subr.mxu0 0.0
        %417 = vmatpush1.msra.mxu0 0.0
        %418 = vmatprep.subr.mxu0 0.0
        %419 = vmatpush1.msra.mxu0 0.0
        %420 = vmatprep.subr.mxu0 0.0
        %421 = vmatpush1.msra.mxu0 0.0
        %422 = vmatprep.subr.mxu0 0.0
        %423 = vmatpush1.msra.mxu0 0.0
        %424 = vmatprep.subr.mxu0 0.0
        %425 = vmatpush1.msra.mxu0 0.0
        %426 = vmatprep.subr.mxu0 0.0
        %427 = vmatpush1.msra.mxu0 0.0
        %428 = vmatprep.subr.mxu0 0.0
        %429 = vmatpush1.msra.mxu0 0.0
        %430 = vmatprep.subr.mxu0 0.0
        %431 = vmatpush1.msra.mxu0 0.0
        %432 = vmatprep.subr.mxu0 0.0
        %433 = vmatpush1.msra.mxu0 0.0
        %434 = vmatprep.subr.mxu0 0.0
        %435 = vmatpush1.msra.mxu0 0.0
        %436 = vmatprep.subr.mxu0 0.0
        %437 = vmatpush1.msra.mxu0 0.0
        %438 = vmatprep.subr.mxu0 0.0
        %439 = vmatpush1.msra.mxu0 0.0
        %440 = vmatprep.subr.mxu0 0.0
        %441 = vmatpush1.msra.mxu0 0.0
        %442 = vmatprep.subr.mxu0 0.0
        %443 = vmatpush1.msra.mxu0 0.0
        %444 = vmatprep.subr.mxu0 0.0
        %445 = vmatpush1.msra.mxu0 0.0
        %446 = vmatprep.subr.mxu0 0.0
        %447 = vmatpush1.msra.mxu0 0.0
        %448 = vmatprep.subr.mxu0 0.0
        %449 = vmatpush1.msra.mxu0 0.0
        %450 = vmatprep.subr.mxu0 0.0
        %451 = vmatpush1.msra.mxu0 0.0
        %452 = vmatprep.subr.mxu0 0.0
        %453 = vmatpush1.msra.mxu0 0.0
        %454 = vmatprep.subr.mxu0 0.0
        %455 = vmatpush1.msra.mxu0 0.0
        %456 = vmatprep.subr.mxu0 0.0
        %457 = vmatpush1.msra.mxu0 0.0
        %458 = vmatprep.mubr.f32.mxu0 0.0
        %459 = vmatmul.mubr.f32.gmra.mrb[0].mxu0 %v386
        %v460 = vpop.f32.mrb[0].mxu0
        %v461 = vadd.f32 %v382, %v460
        %v462 = vpop.f32.mrb[0].mxu0
        %463 = vmatprep.mubr.f32.mxu0 0.0
        %464 = vmatmul.mubr.f32.gmra.mrb[0].mxu0 %v389
        %v465 = vpop.f32.mrb[0].mxu0
        %v466 = vadd.f32 %v382, %v465
        %v467 = vpop.f32.mrb[0].mxu0
        %468 = vmatprep.mubr.f32.mxu0 0.0
        %469 = vmatmul.mubr.f32.gmra.mrb[0].mxu0 %v392
        %v470 = vpop.f32.mrb[0].mxu0
        %v471 = vadd.f32 %v382, %v470
        %v472 = vpop.f32.mrb[0].mxu0
        %473 = vdwg.mxu0
        %474 = vst [vmem:[%s245] sm:$0xff] %v461
        %475 = vst [vmem:[%s245 + $0x8] sm:$0xff] %v466
        %476 = vst [vmem:[%s245 + $0x10] sm:$0xff] %v471
        %s477 = sand.u32 %s138, 1
        %s478 = scalar_lea.sflag [#allocation4], %s477
        %s479 = sand.u32 %s138, 1
        %s480 = smul.addr %s479, 24
        %s481 = scalar_lea.vmem [#allocation5], %s480
        // Predicated region
        $region45: #{tpu_custom_call.1} parent=39 // pred_check
          %p482 = pneg %p148
        $region46: #{tpu_custom_call.1} parent=39 // pred_check_branch
          %484 = sbr.rel (%p482) target = $region48
        $region47: #{tpu_custom_call.1} parent=39 // pred_region
          %s485 = smul.u32 3, %s20
          %s486 = ssub.s32 5, %s485
          %p487 = scmp.lt.s32.totalorder %s486, 3
          %s488 = scalar_select %p487, %s486, 3
          %s489 = smul.u32 128, %s488
          %s491 = ssub.s32 384, %s489
          %492 = vsyncadd %s478, %s491
          %p493 = scmp.ne.s32.totalorder 0, %s489
          %s494 = smul.addr %s485, 128
          %s495 = scalar_lea.hbm %s5, %s494
          %s496 = smul.u32 8, %s488
          %s497 = sshll.u32 %s481, 4
          %s498 = int_to_ptr.vmem [resolvable:$true] %s497
          %s499 = sshll.u32 %s496, 4
          %503 = dma.vmem_to_hbm [thread:$0]  (%p493), %s498, %s499, %s495, %s478, 128, 128, 8
        $region48: #{tpu_custom_call.1} parent=39 // pred_fallthru
          _
      $region40: #{tpu_custom_call.1} parent=5 // pred_fallthru
        _
      %p504 = scmp.le.s32.totalorder 2, %s15
      // Predicated region
      $region49: #{tpu_custom_call.1} parent=5 // pred_check
        %p505 = pneg %p504
      $region50: #{tpu_custom_call.1} parent=5 // pred_check_branch
        %507 = sbr.rel (%p505) target = $region52
      $region51: #{tpu_custom_call.1} parent=5 // pred_region
        %s508 = ssub.s32 %s15, 2
        // Predicated region
        $region53: #{tpu_custom_call.1} parent=51 // pred_check
          %p509 = pneg %p154
        $region54: #{tpu_custom_call.1} parent=51 // pred_check_branch
          %511 = sbr.rel (%p509) target = $region56
        $region55: #{tpu_custom_call.1} parent=51 // pred_region
          %s512 = sand.u32 %s139, 1
          %s513 = scalar_lea.sflag [#allocation4], %s512
          %s514 = sand.u32 %s139, 1
          %s515 = smul.addr %s514, 24
          %s516 = scalar_lea.vmem [#allocation5], %s515
          %517 = dma.done %s513, 384
        $region56: #{tpu_custom_call.1} parent=51 // pred_fallthru
          _
      $region52: #{tpu_custom_call.1} parent=5 // pred_fallthru
        _
    $region6: #{tpu_custom_call.1} parent=1 // loop_footer
      %s19 = sadd.s32 1, %s15
    $region7: #{tpu_custom_call.1} parent=1 // loop_footer_branch
      %14 = sbr.rel target = $region3
    $region8: #{tpu_custom_call.1} parent=1 // loop_exit
      _
    %518 = vsyncpa [#allocation3], 1
    %s519 = scalar_lea.sflag [#allocation3], 1
    %520 = vsyncpa %s519, 1
    %521 = vsyncpa [#allocation4], 1
    %s522 = scalar_lea.sflag [#allocation4], 1
    %523 = vsyncpa %s522, 1

</llo_original>
